<compile_context>
chip_gen: v5e
topology: v5e:2x2
jax: 0.10.0
libtpu: 0.0.40
codegen_flags: <defaults>
</compile_context>

<pallas_src>
import functools

import jax
import jax.numpy as jnp
from jax.experimental import pallas as pl
from jax.experimental.pallas import tpu as pltpu


def _graph_projection_kernel(x_ref, wlt_ref, wp_ref, bias_ref, o_ref, *,
                             tb, n_nodes, f_in, f_out_pad):
    # x_ref   : (tb, N, F_in)      f32  natural (batch, node, feature) layout
    # wlt_ref : (F_in, F_out_pad)  f32  linear.weight^T, zero-padded lanes
    # wp_ref  : (N, N)             f32  project_matrices.weight
    # bias_ref: (N, F_out_pad)     f32  bp[:,None]*rowsum(Wl)[None,:] + bl, padded
    # o_ref   : (tb, N, F_out_pad) f32  relu(Wp @ (x @ Wl^T) + bias)
    x = x_ref[...].reshape(tb * n_nodes, f_in)      # free relayout (N == sublanes)

    # (1) Feature linear: one big MXU matmul over all tb*N rows, 128-wide output.
    u = jnp.dot(x, wlt_ref[...], preferred_element_type=jnp.float32)
    u = u.reshape(tb, n_nodes, f_out_pad)           # (tb, N, F_out_pad)

    # (2) Node mixing: batched (N, N) @ (N, F_out_pad) matmul, one per batch row.
    wp_b = jnp.broadcast_to(wp_ref[...], (tb, n_nodes, n_nodes))
    y = jax.lax.dot_general(
        wp_b, u,
        dimension_numbers=(((2,), (1,)), ((0,), (0,))),
        preferred_element_type=jnp.float32)         # (tb, N, F_out_pad)

    # (3) Folded bias + ReLU, stored as a lane-dense (tb, N, 128) block.
    o_ref[...] = jnp.maximum(y + bias_ref[...][None, :, :], 0.0)


def graph_projection_layer(x, wp, bp, wl, bl, *, vmem_budget_bytes=24 << 20):
    """relu(linear(project_matrices(x^T)^T)) for x of shape (B, N, F_in).

    wp: (N, N), bp: (N,), wl: (F_out, F_in), bl: (F_out,). Returns (B, N, F_out) f32.
    """
    B, N, F_in = x.shape
    F_out, F_in_w = wl.shape
    assert F_in_w == F_in and wp.shape == (N, N)

    f_out_pad = ((F_out + 127) // 128) * 128        # lane-dense output width

    # ---- one-time layout work, hoisted to the wrapper (no x transpose) ------
    x = x.astype(jnp.float32)
    wp32 = wp.astype(jnp.float32)
    wl32 = wl.astype(jnp.float32)
    wlt = jnp.zeros((F_in, f_out_pad), jnp.float32).at[:, :F_out].set(wl32.T)
    bias2d = jnp.zeros((N, f_out_pad), jnp.float32).at[:, :F_out].set(
        bp.astype(jnp.float32)[:, None] * jnp.sum(wl32, axis=1)[None, :]
        + bl.astype(jnp.float32)[None, :])

    # ---- per-step batch block: single step unless B is very large -----------
    # (one TC on v5e/v6e -> grid is a serial loop; only block when the
    #  double-buffered x/out blocks would strain VMEM or unroll size)
    bytes_per_batch = 4 * (N * F_in + N * f_out_pad)
    max_tb_vmem = max(1, vmem_budget_bytes // (2 * bytes_per_batch))
    tb = min(B, 128, max_tb_vmem)
    b_pad = pl.cdiv(B, tb) * tb
    if b_pad != B:
        x = jnp.concatenate(
            [x, jnp.zeros((b_pad - B, N, F_in), jnp.float32)], axis=0)

    grid = (b_pad // tb,)
    kernel = functools.partial(_graph_projection_kernel, tb=tb, n_nodes=N,
                               f_in=F_in, f_out_pad=f_out_pad)

    cost = pl.CostEstimate(
        flops=2 * b_pad * N * F_in * f_out_pad + 2 * b_pad * N * N * f_out_pad,
        transcendentals=0,
        bytes_accessed=4 * (b_pad * N * F_in + wlt.size + wp32.size
                            + bias2d.size + b_pad * N * f_out_pad))

    out = pl.pallas_call(
        kernel,
        out_shape=jax.ShapeDtypeStruct((b_pad, N, f_out_pad), jnp.float32),
        grid=grid,
        in_specs=[
            pl.BlockSpec((tb, N, F_in), lambda j: (j, 0, 0)),    # x, natural layout
            pl.BlockSpec((F_in, f_out_pad), lambda j: (0, 0)),   # Wl^T (padded)
            pl.BlockSpec((N, N), lambda j: (0, 0)),              # Wp
            pl.BlockSpec((N, f_out_pad), lambda j: (0, 0)),      # folded bias
        ],
        out_specs=pl.BlockSpec((tb, N, f_out_pad), lambda j: (j, 0, 0)),
        compiler_params=pltpu.CompilerParams(
            dimension_semantics=("parallel",),
            vmem_limit_bytes=32 * 1024 * 1024),
        cost_estimate=cost,
    )(x, wlt, wp32, bias2d)

    # TODO(synk): for very large num_nodes N, Wp would need its own N-tiling grid
    # axis and the constant-weight in_specs should be single-buffered
    # (pipeline_mode=pl.Buffered(1)) to respect v7x's 64 MiB VMEM.
    return out[:B, :, :F_out]


def _reference(x, wp, bp, wl, bl):
    # Pure-JAX reference mirroring the PyTorch forward exactly (exact f32 matmuls).
    hp = jax.lax.Precision.HIGHEST
    x_t = jnp.swapaxes(x, -1, -2)                                   # (B, F_in, N)
    x_w_proj = jnp.einsum("bfm,nm->bfn", x_t, wp, precision=hp) + bp
    z = jnp.swapaxes(x_w_proj, -1, -2)                              # (B, N, F_in)
    y = jnp.einsum("bnf,of->bno", z, wl, precision=hp) + bl         # (B, N, F_out)
    return jax.nn.relu(y)


if __name__ == "__main__":
    def make_params(key, N, F_in, F_out):
        kwp, kbp, kwl, kbl = jax.random.split(key, 4)
        bound_p = 1.0 / float(N) ** 0.5
        wp = jax.random.uniform(kwp, (N, N), jnp.float32, -bound_p, bound_p)
        bp = jax.random.uniform(kbp, (N,), jnp.float32, -bound_p, bound_p)
        bound_l = 1.0 / float(F_in) ** 0.5
        wl = jax.random.uniform(kwl, (F_out, F_in), jnp.float32, -bound_l, bound_l)
        bl = jax.random.uniform(kbl, (F_out,), jnp.float32, -bound_l, bound_l)
        return wp, bp, wl, bl

    def run_case(key, B, N, F_in, F_out):
        kx, kp = jax.random.split(key)
        x = jax.random.normal(kx, (B, N, F_in), jnp.float32)
        wp, bp, wl, bl = make_params(kp, N, F_in, F_out)
        out = jax.block_until_ready(graph_projection_layer(x, wp, bp, wl, bl))
        ref = _reference(x, wp, bp, wl, bl)
        assert out.shape == (B, N, F_out)
        # f32 operands throughout; tolerance only covers the MXU's default f32
        # matmul pass precision on some generations (typically far tighter).
        err = float(jnp.max(jnp.abs(out - ref)))
        assert jnp.allclose(out, ref, atol=2e-2, rtol=1e-2), f"max abs err {err}"

    key = jax.random.PRNGKey(0)
    k1, k2 = jax.random.split(key)
    # Module-sized test: B=2, N=8, F_in=32, F_out=16 -> single grid step.
    run_case(k1, B=2, N=8, F_in=32, F_out=16)
    # Larger batch: B=32 -> still a single grid step; feature matmul has 256 rows
    # (fills a v6e/v7x MXU tile), node mixing is 32 batched (8,8)@(8,128) passes.
    run_case(k2, B=32, N=8, F_in=32, F_out=16)
    print("KERNEL_OK")
</pallas_src>

<mosaic_0001>
module attributes {stable_mosaic.version = 11 : i64} {
  func.func @_graph_projection_kernel(%arg0: i32, %arg1: memref<2x8x32xf32, #tpu.memory_space<vmem>>, %arg2: memref<32x128xf32, #tpu.memory_space<vmem>>, %arg3: memref<8x8xf32, #tpu.memory_space<vmem>>, %arg4: memref<8x128xf32, #tpu.memory_space<vmem>>, %arg5: memref<2x8x128xf32, #tpu.memory_space<vmem>>) attributes {dimension_semantics = [#tpu.dimension_semantics<parallel>], iteration_bounds = array<i64: 1>, scalar_prefetch = 0 : i64, scratch_operands = 0 : i64, tpu.core_type = #tpu.core_type<tc>, window_params = [{transform_indices = @transform_0, window_bounds = array<i64: 2, 8, 32>}, {pipeline_mode = #tpu.pipeline_mode<synchronous>, transform_indices = @transform_1, window_bounds = array<i64: 32, 128>}, {pipeline_mode = #tpu.pipeline_mode<synchronous>, transform_indices = @transform_2, window_bounds = array<i64: 8, 8>}, {pipeline_mode = #tpu.pipeline_mode<synchronous>, transform_indices = @transform_3, window_bounds = array<i64: 8, 128>}, {transform_indices = @transform_4, window_bounds = array<i64: 2, 8, 128>}]} {
    %c0 = arith.constant 0 : index
    %c0_0 = arith.constant 0 : index
    %c0_1 = arith.constant 0 : index
    %0 = vector.load %arg1[%c0, %c0_0, %c0_1] : memref<2x8x32xf32, #tpu.memory_space<vmem>>, vector<2x8x32xf32>
    %1 = vector.shape_cast %0 : vector<2x8x32xf32> to vector<16x32xf32>
    %c0_2 = arith.constant 0 : index
    %c0_3 = arith.constant 0 : index
    %2 = vector.load %arg2[%c0_2, %c0_3] : memref<32x128xf32, #tpu.memory_space<vmem>>, vector<32x128xf32>
    %cst = arith.constant dense<0.000000e+00> : vector<16x128xf32>
    %3 = tpu.matmul %1, %2, %cst {dimension_numbers = #tpu.dot_dimension_numbers<[1], [0], [0], [1], [0, 0, 1, 1], [], []>} : vector<16x32xf32>, vector<32x128xf32>, vector<16x128xf32> -> vector<16x128xf32>
    %4 = vector.shape_cast %3 : vector<16x128xf32> to vector<2x8x128xf32>
    %c0_4 = arith.constant 0 : index
    %c0_5 = arith.constant 0 : index
    %5 = vector.load %arg3[%c0_4, %c0_5] : memref<8x8xf32, #tpu.memory_space<vmem>>, vector<8x8xf32>
    %6 = vector.shape_cast %5 : vector<8x8xf32> to vector<1x8x8xf32>
    %7 = vector.broadcast %6 : vector<1x8x8xf32> to vector<2x8x8xf32>
    %cst_6 = arith.constant dense<0.000000e+00> : vector<2x8x128xf32>
    %8 = tpu.matmul %7, %4, %cst_6 {dimension_numbers = #tpu.dot_dimension_numbers<[2], [1], [1], [2], [0, 0, 0, 1, 1, 2], [0], [0]>} : vector<2x8x8xf32>, vector<2x8x128xf32>, vector<2x8x128xf32> -> vector<2x8x128xf32>
    %c0_7 = arith.constant 0 : index
    %c0_8 = arith.constant 0 : index
    %9 = vector.load %arg4[%c0_7, %c0_8] : memref<8x128xf32, #tpu.memory_space<vmem>>, vector<8x128xf32>
    %10 = vector.shape_cast %9 : vector<8x128xf32> to vector<1x8x128xf32>
    %11 = vector.broadcast %10 : vector<1x8x128xf32> to vector<2x8x128xf32>
    %12 = arith.addf %8, %11 : vector<2x8x128xf32>
    %cst_9 = arith.constant 0.000000e+00 : f32
    %13 = vector.broadcast %cst_9 : f32 to vector<2x8x128xf32>
    %14 = arith.maximumf %12, %13 : vector<2x8x128xf32>
    %c0_10 = arith.constant 0 : index
    %c0_11 = arith.constant 0 : index
    %c0_12 = arith.constant 0 : index
    %15 = vector.load %arg5[%c0_10, %c0_11, %c0_12] : memref<2x8x128xf32, #tpu.memory_space<vmem>>, vector<2x8x128xf32>
    tpu.vector_store %arg5[%c0_10, %c0_11, %c0_12], %14 {strides = array<i32>} : memref<2x8x128xf32, #tpu.memory_space<vmem>>, vector<2x8x128xf32>,
    return
  }
  func.func @transform_0(%arg0: i32) -> (i32, i32, i32) {
    %c0_i32 = arith.constant 0 : i32
    %c0_i32_0 = arith.constant 0 : i32
    %c0_i32_1 = arith.constant 0 : i32
    return %arg0, %c0_i32, %c0_i32_0 : i32, i32, i32
  }
  func.func @transform_1(%arg0: i32) -> (i32, i32) {
    %c0_i32 = arith.constant 0 : i32
    %c0_i32_0 = arith.constant 0 : i32
    %c0_i32_1 = arith.constant 0 : i32
    return %c0_i32, %c0_i32_0 : i32, i32
  }
  func.func @transform_2(%arg0: i32) -> (i32, i32) {
    %c0_i32 = arith.constant 0 : i32
    %c0_i32_0 = arith.constant 0 : i32
    %c0_i32_1 = arith.constant 0 : i32
    return %c0_i32, %c0_i32_0 : i32, i32
  }
  func.func @transform_3(%arg0: i32) -> (i32, i32) {
    %c0_i32 = arith.constant 0 : i32
    %c0_i32_0 = arith.constant 0 : i32
    %c0_i32_1 = arith.constant 0 : i32
    return %c0_i32, %c0_i32_0 : i32, i32
  }
  func.func @transform_4(%arg0: i32) -> (i32, i32, i32) {
    %c0_i32 = arith.constant 0 : i32
    %c0_i32_0 = arith.constant 0 : i32
    %c0_i32_1 = arith.constant 0 : i32
    return %arg0, %c0_i32, %c0_i32_0 : i32, i32, i32
  }
}

</mosaic_0001>

<llo_original>
// kernel: tpu_custom_call.1
$region0: #{tpu_custom_call.1}
  #allocation0 [shape = 'u32[]', space=smem, size = 0x4, offset = 0x4, fixed_abs, tag = 'smem constant byte address 0x4 - core index']
  #allocation1 [shape = 'u32[72,128]{1,0:T(1,128)}', space=vmem, size = 0x9000, scoped, tag = 'internal scratch']
  %s0 = inlined_call_operand.hbm [shape: f32[2,8,32], index: 0, kind: input, shape index: {}]
  %s1 = inlined_call_operand.hbm [shape: f32[32,128], index: 1, kind: input, shape index: {}]
  %s2 = inlined_call_operand.hbm [shape: f32[8,8], index: 2, kind: input, shape index: {}]
  %s3 = inlined_call_operand.hbm [shape: f32[8,128], index: 3, kind: input, shape index: {}]
  %s4 = inlined_call_operand.hbm [shape: f32[2,8,128], index: 4, kind: output, shape index: {}]
  %s5 = sld [smem:[#allocation0]]
  $region42: #{tpu_custom_call.1} parent=0
    _
  %s7 = ssub.s32 1, %s5
  %s8 = scalar_select 0, %s7, %s5
  $region1: #{tpu_custom_call.1} parent=0
    #allocation2 [shape = 'u8[8192]{0}', space=vmem, size = 0x2000, scoped, tag = 'input window, operand 0, single buffered']
    #allocation3 [shape = 's32[1]{0}', space=sflag, size = 0x4, scoped, tag = 'scoped memory for tpu_custom_call.1']
    #allocation4 [shape = 's32[1]{0}', space=sflag, size = 0x4, scoped, tag = 'scoped memory for tpu_custom_call.1']
    #allocation5 [shape = 'u8[16384]{0}', space=vmem, size = 0x4000, scoped, tag = 'input window, operand 1, single buffered']
    #allocation6 [shape = 's32[1]{0}', space=sflag, size = 0x4, scoped, tag = 'scoped memory for tpu_custom_call.1']
    #allocation7 [shape = 'u8[4096]{0}', space=vmem, size = 0x1000, scoped, tag = 'input window, operand 2, single buffered']
    #allocation8 [shape = 'u8[4096]{0}', space=vmem, size = 0x1000, scoped, tag = 'input window, operand 3, single buffered']
    #allocation9 [shape = 's32[1]{0}', space=sflag, size = 0x4, scoped, tag = 'scoped memory for tpu_custom_call.1']
    #allocation10 [shape = 'u8[8192]{0}', space=vmem, size = 0x2000, scoped, tag = 'output window, operand 0, single buffered']
    %9 = vsyncpa [#allocation3], 0
    %10 = vsyncpa [#allocation6], 0
    %11 = vsyncpa [#allocation9], 0
    %12 = vsyncpa [#allocation4], 0
    // Predicated region
    $region2: #{tpu_custom_call.1} parent=1 // pred_check
      _
    $region3: #{tpu_custom_call.1} parent=1 // pred_check_branch
      %14 = sbr.rel (0) target = $region5
    $region4: #{tpu_custom_call.1} parent=1 // pred_region
      %16 = vsyncadd [#allocation3], 0
      %s17 = sshll.u32 %s0, 4
      %s18 = int_to_ptr.hbm [resolvable:$true] %s17
      %s19 = sshll.u32 [#allocation2], 4
      %s20 = int_to_ptr.vmem [resolvable:$true] %s19
      %25 = dma.hbm_to_vmem [thread:$0]  %s18, 256, %s20, [#allocation3], 128, 128, 8
    $region5: #{tpu_custom_call.1} parent=1 // pred_fallthru
      _
    // Predicated region
    $region6: #{tpu_custom_call.1} parent=1 // pred_check
      _
    $region7: #{tpu_custom_call.1} parent=1 // pred_check_branch
      %27 = sbr.rel (0) target = $region9
    $region8: #{tpu_custom_call.1} parent=1 // pred_region
      %29 = vsyncadd [#allocation6], 0
      %s30 = sshll.u32 %s1, 4
      %s31 = int_to_ptr.hbm [resolvable:$true] %s30
      %s32 = sshll.u32 [#allocation5], 4
      %s33 = int_to_ptr.vmem [resolvable:$true] %s32
      %38 = dma.hbm_to_vmem [thread:$0]  %s31, 512, %s33, [#allocation6], 128, 128, 8
    $region9: #{tpu_custom_call.1} parent=1 // pred_fallthru
      _
    // Predicated region
    $region10: #{tpu_custom_call.1} parent=1 // pred_check
      _
    $region11: #{tpu_custom_call.1} parent=1 // pred_check_branch
      %40 = sbr.rel (0) target = $region13
    $region12: #{tpu_custom_call.1} parent=1 // pred_region
      %42 = vsyncadd [#allocation6], 0
      %s44 = sshll.u32 %s2, 4
      %s45 = int_to_ptr.hbm [resolvable:$true] %s44
      %s46 = sshll.u32 [#allocation7], 4
      %s47 = int_to_ptr.vmem [resolvable:$true] %s46
      %49 = dma.hbm_to_vmem [thread:$0]  %s45, 128, %s47, [#allocation6]
    $region13: #{tpu_custom_call.1} parent=1 // pred_fallthru
      _
    // Predicated region
    $region14: #{tpu_custom_call.1} parent=1 // pred_check
      _
    $region15: #{tpu_custom_call.1} parent=1 // pred_check_branch
      %51 = sbr.rel (0) target = $region17
    $region16: #{tpu_custom_call.1} parent=1 // pred_region
      %53 = vsyncadd [#allocation9], 0
      %s55 = sshll.u32 %s3, 4
      %s56 = int_to_ptr.hbm [resolvable:$true] %s55
      %s57 = sshll.u32 [#allocation8], 4
      %s58 = int_to_ptr.vmem [resolvable:$true] %s57
      %60 = dma.hbm_to_vmem [thread:$0]  %s56, 128, %s58, [#allocation9]
    $region17: #{tpu_custom_call.1} parent=1 // pred_fallthru
      _
    // Predicated region
    $region18: #{tpu_custom_call.1} parent=1 // pred_check
      _
    $region19: #{tpu_custom_call.1} parent=1 // pred_check_branch
      %62 = sbr.rel (0) target = $region21
    $region20: #{tpu_custom_call.1} parent=1 // pred_region
      %64 = dma.done [#allocation3], 256
    $region21: #{tpu_custom_call.1} parent=1 // pred_fallthru
      _
    // Predicated region
    $region22: #{tpu_custom_call.1} parent=1 // pred_check
      _
    $region23: #{tpu_custom_call.1} parent=1 // pred_check_branch
      %66 = sbr.rel (0) target = $region25
    $region24: #{tpu_custom_call.1} parent=1 // pred_region
      %68 = dma.done [#allocation6], 512
    $region25: #{tpu_custom_call.1} parent=1 // pred_fallthru
      _
    // Predicated region
    $region26: #{tpu_custom_call.1} parent=1 // pred_check
      _
    $region27: #{tpu_custom_call.1} parent=1 // pred_check_branch
      %70 = sbr.rel (0) target = $region29
    $region28: #{tpu_custom_call.1} parent=1 // pred_region
      %72 = dma.done [#allocation6], 128
    $region29: #{tpu_custom_call.1} parent=1 // pred_fallthru
      _
    // Predicated region
    $region30: #{tpu_custom_call.1} parent=1 // pred_check
      _
    $region31: #{tpu_custom_call.1} parent=1 // pred_check_branch
      %74 = sbr.rel (0) target = $region33
    $region32: #{tpu_custom_call.1} parent=1 // pred_region
      %76 = dma.done [#allocation9], 128
    $region33: #{tpu_custom_call.1} parent=1 // pred_fallthru
      _
    %v77 = vld [vmem:[#allocation2] sm:$0xff]
    %v78 = vld [vmem:[#allocation2 + $0x8] sm:$0xff]
    %v79 = vld [vmem:[#allocation5] sm:$0xff]
    %v80 = vld [vmem:[#allocation5 + $0x8] sm:$0xff]
    %v81 = vld [vmem:[#allocation5 + $0x10] sm:$0xff]
    %v82 = vld [vmem:[#allocation5 + $0x18] sm:$0xff]
    %vm83 = vcmask 261120
    %v85 = vsel %vm83, %v77, 0
    %v88 = vsel %vm83, %v78, 0
    %90 = vmatpush.msra.mxu0 0.0
    %91 = vmatpush.msra.mxu0 0.0
    %92 = vmatpush.msra.mxu0 0.0
    %93 = vmatpush.msra.mxu0 0.0
    %94 = vmatpush.msra.mxu0 0.0
    %95 = vmatpush.msra.mxu0 0.0
    %96 = vmatpush.msra.mxu0 0.0
    %97 = vmatpush.msra.mxu0 0.0
    %98 = vmatpush.msra.mxu0 0.0
    %99 = vmatpush.msra.mxu0 0.0
    %100 = vmatpush.msra.mxu0 0.0
    %101 = vmatpush.msra.mxu0 0.0
    %102 = vmatpush.msra.mxu0 %v82
    %103 = vmatpush.msra.mxu0 %v81
    %104 = vmatpush.msra.mxu0 %v80
    %105 = vmatpush.msra.mxu0 %v79
    %106 = vmatmul.f32.gmra.mxu0 %v85
    %v107 = vpop.f32.mrf.mxu0
    %v108 = vadd.f32 0.0, %v107
    %109 = vmatmul.f32.gmra.mxu0 %v88
    %v110 = vpop.f32.mrf.mxu0
    %v111 = vadd.f32 0.0, %v110
    %112 = vdwg.mxu0
    %v113 = vld [vmem:[#allocation7] sm:$0xff]
    %v114 = vld [vmem:[#allocation8] sm:$0xff]
    %vm115 = vcmask 64512
    %v117 = vsel %vm115, %v113, 0
    %119 = vmatpush.msra.mxu0 0.0
    %120 = vmatpush.msra.mxu0 0.0
    %121 = vmatpush.msra.mxu0 0.0
    %122 = vmatpush.msra.mxu0 0.0
    %123 = vmatpush.msra.mxu0 0.0
    %124 = vmatpush.msra.mxu0 0.0
    %125 = vmatpush.msra.mxu0 0.0
    %126 = vmatpush.msra.mxu0 0.0
    %127 = vmatpush.msra.mxu0 0.0
    %128 = vmatpush.msra.mxu0 0.0
    %129 = vmatpush.msra.mxu0 0.0
    %130 = vmatpush.msra.mxu0 0.0
    %131 = vmatpush.msra.mxu0 0.0
    %132 = vmatpush.msra.mxu0 0.0
    %133 = vmatpush.msra.mxu0 0.0
    %134 = vmatpush.msra.mxu0 %v108
    %135 = vmatmul.f32.gmra.mxu0 %v117
    %v136 = vpop.f32.mrf.mxu0
    %v137 = vadd.f32 %v114, %v136
    %138 = vdwg.mxu0
    %139 = vmatpush.msra.mxu0 0.0
    %140 = vmatpush.msra.mxu0 0.0
    %141 = vmatpush.msra.mxu0 0.0
    %142 = vmatpush.msra.mxu0 0.0
    %143 = vmatpush.msra.mxu0 0.0
    %144 = vmatpush.msra.mxu0 0.0
    %145 = vmatpush.msra.mxu0 0.0
    %146 = vmatpush.msra.mxu0 0.0
    %147 = vmatpush.msra.mxu0 0.0
    %148 = vmatpush.msra.mxu0 0.0
    %149 = vmatpush.msra.mxu0 0.0
    %150 = vmatpush.msra.mxu0 0.0
    %151 = vmatpush.msra.mxu0 0.0
    %152 = vmatpush.msra.mxu0 0.0
    %153 = vmatpush.msra.mxu0 0.0
    %154 = vmatpush.msra.mxu0 %v111
    %155 = vmatmul.f32.gmra.mxu0 %v117
    %v156 = vpop.f32.mrf.mxu0
    %v157 = vadd.f32 %v114, %v156
    %158 = vdwg.mxu0
    %v159 = vmax.f32 %v137, 0.0
    %v160 = vmax.f32 %v157, 0.0
    %161 = vst [vmem:[#allocation10] sm:$0xff] %v159
    %162 = vst [vmem:[#allocation10 + $0x8] sm:$0xff] %v160
    // Predicated region
    $region34: #{tpu_custom_call.1} parent=1 // pred_check
      _
    $region35: #{tpu_custom_call.1} parent=1 // pred_check_branch
      %164 = sbr.rel (0) target = $region37
    $region36: #{tpu_custom_call.1} parent=1 // pred_region
      %166 = vsyncadd [#allocation4], 0
      %s167 = sshll.u32 [#allocation10], 4
      %s168 = int_to_ptr.vmem [resolvable:$true] %s167
      %s169 = sshll.u32 %s4, 4
      %s170 = int_to_ptr.hbm [resolvable:$true] %s169
      %175 = dma.vmem_to_hbm [thread:$0]  %s168, 256, %s170, [#allocation4], 128, 128, 8
    $region37: #{tpu_custom_call.1} parent=1 // pred_fallthru
      _
    // Predicated region
    $region38: #{tpu_custom_call.1} parent=1 // pred_check
      _
    $region39: #{tpu_custom_call.1} parent=1 // pred_check_branch
      %177 = sbr.rel (0) target = $region41
    $region40: #{tpu_custom_call.1} parent=1 // pred_region
      %179 = dma.done [#allocation4], 256
    $region41: #{tpu_custom_call.1} parent=1 // pred_fallthru
      _
    %180 = vsyncpa [#allocation3], 1
    %181 = vsyncpa [#allocation6], 1
    %182 = vsyncpa [#allocation9], 1
    %183 = vsyncpa [#allocation4], 1

</llo_original>
